<compile_context>
chip_gen: v5e
topology: v5e:2x2
jax: 0.10.0
libtpu: 0.0.40
codegen_flags: <defaults>
</compile_context>

<pallas_src>
import jax
import jax.numpy as jnp
from jax.experimental import pallas as pl
from jax.experimental.pallas import tpu as pltpu


IN_DIM = 3
HIDDEN = 128
OUT_DIM = 512
TILE_BATCH_CAP = 1024  # safe on v7x's smaller VMEM; ~86% HBM roofline tile size


def _round_up(n, m):
    return (n + m - 1) // m * m


def _mlp_kernel(x_ref, w1_ref, b1_ref, w2_ref, b2_ref, o_ref):
    # x_ref:  (TB, 3)       f32
    # w1_ref: (3, 128)      f32
    # b1_ref: (1, 128)      f32
    # w2_ref: (128, 512)    bf16
    # b2_ref: (1, 512)      f32
    # o_ref:  (TB, 512)     f32
    x = x_ref[...]
    w1 = w1_ref[...]

    # Layer 1: K=3 contraction is <3% MXU utilization, so do it on the
    # (otherwise idle) VPU as three broadcast FMAs + bias.
    h = (x[:, 0:1] * w1[0:1, :]
         + x[:, 1:2] * w1[1:2, :]
         + x[:, 2:3] * w1[2:3, :]
         + b1_ref[...])
    h = jnp.maximum(h, 0.0)  # ReLU (f32 on the VPU)

    # Layer 2: 128x512 matmul on the MXU, bf16 operands, f32 accumulation.
    o = jnp.dot(h.astype(jnp.bfloat16), w2_ref[...],
                preferred_element_type=jnp.float32) + b2_ref[...]
    o_ref[...] = o.astype(o_ref.dtype)


def pos_feature_extractor(x, w1, b1, w2, b2, *, tile_batch=TILE_BATCH_CAP,
                          out_dtype=jnp.float32):
    """x: (B, ...) flattened to (B, 3). Returns (B, 512) in `out_dtype`."""
    b = x.shape[0]
    # Flatten trailing dims only if needed (avoid a no-op reshape/copy).
    x2 = x if x.ndim == 2 else x.reshape(b, -1)
    if x2.dtype != jnp.float32:
        x2 = x2.astype(jnp.float32)
    assert x2.shape[1] == IN_DIM, f"expected {IN_DIM} features, got {x2.shape[1]}"

    # Batch tile: multiple of 8 (sublane), capped for v7x VMEM headroom.
    tb = min(tile_batch, _round_up(b, 8))
    b_pad = _round_up(b, tb)
    if b_pad != b:
        x2 = jnp.pad(x2, ((0, b_pad - b), (0, 0)))

    out = pl.pallas_call(
        _mlp_kernel,
        out_shape=jax.ShapeDtypeStruct((b_pad, OUT_DIM), out_dtype),
        grid=(b_pad // tb,),
        in_specs=[
            pl.BlockSpec((tb, IN_DIM), lambda i: (i, 0)),        # x tile
            pl.BlockSpec((IN_DIM, HIDDEN), lambda i: (0, 0)),    # w1 (resident)
            pl.BlockSpec((1, HIDDEN), lambda i: (0, 0)),         # b1 (resident)
            pl.BlockSpec((HIDDEN, OUT_DIM), lambda i: (0, 0)),   # w2 (resident)
            pl.BlockSpec((1, OUT_DIM), lambda i: (0, 0)),        # b2 (resident)
        ],
        out_specs=pl.BlockSpec((tb, OUT_DIM), lambda i: (i, 0)),
        compiler_params=pltpu.CompilerParams(
            dimension_semantics=("parallel",)),
    )(x2,
      w1,
      b1.reshape(1, HIDDEN),
      w2.astype(jnp.bfloat16),   # bf16 weights: native MXU path, half the DMA
      b2.reshape(1, OUT_DIM))

    return out[:b] if b_pad != b else out


def init_params(key):
    """Deterministic init matching PyTorch Linear shapes.

    torch stores weight as (out, in); we keep (in, out) for the kernel matmul,
    which is just the transpose — semantics are identical.
    """
    k1, k2, k3, k4 = jax.random.split(key, 4)
    bnd1 = 1.0 / jnp.sqrt(IN_DIM)
    bnd2 = 1.0 / jnp.sqrt(HIDDEN)
    w1 = jax.random.uniform(k1, (IN_DIM, HIDDEN), jnp.float32, -bnd1, bnd1)
    b1 = jax.random.uniform(k2, (HIDDEN,), jnp.float32, -bnd1, bnd1)
    w2 = jax.random.uniform(k3, (HIDDEN, OUT_DIM), jnp.float32, -bnd2, bnd2)
    b2 = jax.random.uniform(k4, (OUT_DIM,), jnp.float32, -bnd2, bnd2)
    return w1, b1, w2, b2


def _reference(x, w1, b1, w2, b2):
    b = x.shape[0]
    x2 = x.reshape(b, -1).astype(jnp.float32)
    h = jnp.maximum(x2 @ w1 + b1, 0.0)
    return h @ w2 + b2


if __name__ == "__main__":
    key = jax.random.PRNGKey(0)
    kx, kp, kx2 = jax.random.split(key, 3)
    w1, b1, w2, b2 = init_params(kp)

    # Small demo batch: 8 position vectors of 3 coordinates.
    x = jax.random.normal(kx, (8, IN_DIM), dtype=jnp.float32)
    out = jax.block_until_ready(pos_feature_extractor(x, w1, b1, w2, b2))
    ref = _reference(x, w1, b1, w2, b2)
    assert out.shape == (8, OUT_DIM), out.shape
    # bf16 second-layer matmul -> looser tolerance vs the f32 reference.
    assert jnp.allclose(out, ref, atol=2e-2, rtol=2e-2), "mismatch vs reference (B=8)"

    # Larger batch exercises the grid (>1 step) and the padding path.
    xb = jax.random.normal(kx2, (2056, IN_DIM), dtype=jnp.float32)
    outb = jax.block_until_ready(pos_feature_extractor(xb, w1, b1, w2, b2))
    refb = _reference(xb, w1, b1, w2, b2)
    assert outb.shape == (2056, OUT_DIM), outb.shape
    assert jnp.allclose(outb, refb, atol=2e-2, rtol=2e-2), "mismatch vs reference (B=2056)"

    print("KERNEL_OK")
</pallas_src>

<mosaic_0001>
module attributes {stable_mosaic.version = 11 : i64} {
  func.func @_mlp_kernel(%arg0: i32, %arg1: memref<8x3xf32, #tpu.memory_space<vmem>>, %arg2: memref<3x128xf32, #tpu.memory_space<vmem>>, %arg3: memref<1x128xf32, #tpu.memory_space<vmem>>, %arg4: memref<128x512xbf16, #tpu.memory_space<vmem>>, %arg5: memref<1x512xf32, #tpu.memory_space<vmem>>, %arg6: memref<8x512xf32, #tpu.memory_space<vmem>>) attributes {dimension_semantics = [#tpu.dimension_semantics<parallel>], iteration_bounds = array<i64: 1>, scalar_prefetch = 0 : i64, scratch_operands = 0 : i64, tpu.core_type = #tpu.core_type<tc>, window_params = [{transform_indices = @transform_0, window_bounds = array<i64: 8, 3>}, {pipeline_mode = #tpu.pipeline_mode<synchronous>, transform_indices = @transform_1, window_bounds = array<i64: 3, 128>}, {pipeline_mode = #tpu.pipeline_mode<synchronous>, transform_indices = @transform_2, window_bounds = array<i64: 1, 128>}, {pipeline_mode = #tpu.pipeline_mode<synchronous>, transform_indices = @transform_3, window_bounds = array<i64: 128, 512>}, {pipeline_mode = #tpu.pipeline_mode<synchronous>, transform_indices = @transform_4, window_bounds = array<i64: 1, 512>}, {transform_indices = @transform_5, window_bounds = array<i64: 8, 512>}]} {
    %c0 = arith.constant 0 : index
    %c0_0 = arith.constant 0 : index
    %0 = vector.load %arg1[%c0, %c0_0] : memref<8x3xf32, #tpu.memory_space<vmem>>, vector<8x3xf32>
    %c0_1 = arith.constant 0 : index
    %c0_2 = arith.constant 0 : index
    %1 = vector.load %arg2[%c0_1, %c0_2] : memref<3x128xf32, #tpu.memory_space<vmem>>, vector<3x128xf32>
    %2 = vector.extract_strided_slice %0 {offsets = [0, 0], sizes = [8, 1], strides = [1, 1]} : vector<8x3xf32> to vector<8x1xf32>
    %3 = vector.extract_strided_slice %1 {offsets = [0, 0], sizes = [1, 128], strides = [1, 1]} : vector<3x128xf32> to vector<1x128xf32>
    %4 = vector.broadcast %2 : vector<8x1xf32> to vector<8x128xf32>
    %5 = vector.broadcast %3 : vector<1x128xf32> to vector<8x128xf32>
    %6 = arith.mulf %4, %5 : vector<8x128xf32>
    %7 = vector.extract_strided_slice %0 {offsets = [0, 1], sizes = [8, 1], strides = [1, 1]} : vector<8x3xf32> to vector<8x1xf32>
    %8 = vector.extract_strided_slice %1 {offsets = [1, 0], sizes = [1, 128], strides = [1, 1]} : vector<3x128xf32> to vector<1x128xf32>
    %9 = vector.broadcast %7 : vector<8x1xf32> to vector<8x128xf32>
    %10 = vector.broadcast %8 : vector<1x128xf32> to vector<8x128xf32>
    %11 = arith.mulf %9, %10 : vector<8x128xf32>
    %12 = arith.addf %6, %11 : vector<8x128xf32>
    %13 = vector.extract_strided_slice %0 {offsets = [0, 2], sizes = [8, 1], strides = [1, 1]} : vector<8x3xf32> to vector<8x1xf32>
    %14 = vector.extract_strided_slice %1 {offsets = [2, 0], sizes = [1, 128], strides = [1, 1]} : vector<3x128xf32> to vector<1x128xf32>
    %15 = vector.broadcast %13 : vector<8x1xf32> to vector<8x128xf32>
    %16 = vector.broadcast %14 : vector<1x128xf32> to vector<8x128xf32>
    %17 = arith.mulf %15, %16 : vector<8x128xf32>
    %18 = arith.addf %12, %17 : vector<8x128xf32>
    %c0_3 = arith.constant 0 : index
    %c0_4 = arith.constant 0 : index
    %19 = vector.load %arg3[%c0_3, %c0_4] : memref<1x128xf32, #tpu.memory_space<vmem>>, vector<1x128xf32>
    %20 = vector.broadcast %19 : vector<1x128xf32> to vector<8x128xf32>
    %21 = arith.addf %18, %20 : vector<8x128xf32>
    %cst = arith.constant 0.000000e+00 : f32
    %22 = vector.broadcast %cst : f32 to vector<8x128xf32>
    %23 = arith.maximumf %21, %22 : vector<8x128xf32>
    %24 = arith.truncf %23 : vector<8x128xf32> to vector<8x128xbf16>
    %c0_5 = arith.constant 0 : index
    %c0_6 = arith.constant 0 : index
    %25 = vector.load %arg4[%c0_5, %c0_6] : memref<128x512xbf16, #tpu.memory_space<vmem>>, vector<128x512xbf16>
    %cst_7 = arith.constant dense<0.000000e+00> : vector<8x512xf32>
    %26 = tpu.matmul %24, %25, %cst_7 {dimension_numbers = #tpu.dot_dimension_numbers<[1], [0], [0], [1], [0, 0, 1, 1], [], []>} : vector<8x128xbf16>, vector<128x512xbf16>, vector<8x512xf32> -> vector<8x512xf32>
    %c0_8 = arith.constant 0 : index
    %c0_9 = arith.constant 0 : index
    %27 = vector.load %arg5[%c0_8, %c0_9] : memref<1x512xf32, #tpu.memory_space<vmem>>, vector<1x512xf32>
    %28 = vector.broadcast %27 : vector<1x512xf32> to vector<8x512xf32>
    %29 = arith.addf %26, %28 : vector<8x512xf32>
    %c0_10 = arith.constant 0 : index
    %c0_11 = arith.constant 0 : index
    %30 = vector.load %arg6[%c0_10, %c0_11] : memref<8x512xf32, #tpu.memory_space<vmem>>, vector<8x512xf32>
    tpu.vector_store %arg6[%c0_10, %c0_11], %29 {strides = array<i32>} : memref<8x512xf32, #tpu.memory_space<vmem>>, vector<8x512xf32>,
    return
  }
  func.func @transform_0(%arg0: i32) -> (i32, i32) {
    %c0_i32 = arith.constant 0 : i32
    %c0_i32_0 = arith.constant 0 : i32
    return %arg0, %c0_i32 : i32, i32
  }
  func.func @transform_1(%arg0: i32) -> (i32, i32) {
    %c0_i32 = arith.constant 0 : i32
    %c0_i32_0 = arith.constant 0 : i32
    %c0_i32_1 = arith.constant 0 : i32
    return %c0_i32, %c0_i32_0 : i32, i32
  }
  func.func @transform_2(%arg0: i32) -> (i32, i32) {
    %c0_i32 = arith.constant 0 : i32
    %c0_i32_0 = arith.constant 0 : i32
    %c0_i32_1 = arith.constant 0 : i32
    return %c0_i32, %c0_i32_0 : i32, i32
  }
  func.func @transform_3(%arg0: i32) -> (i32, i32) {
    %c0_i32 = arith.constant 0 : i32
    %c0_i32_0 = arith.constant 0 : i32
    %c0_i32_1 = arith.constant 0 : i32
    return %c0_i32, %c0_i32_0 : i32, i32
  }
  func.func @transform_4(%arg0: i32) -> (i32, i32) {
    %c0_i32 = arith.constant 0 : i32
    %c0_i32_0 = arith.constant 0 : i32
    %c0_i32_1 = arith.constant 0 : i32
    return %c0_i32, %c0_i32_0 : i32, i32
  }
  func.func @transform_5(%arg0: i32) -> (i32, i32) {
    %c0_i32 = arith.constant 0 : i32
    %c0_i32_0 = arith.constant 0 : i32
    return %arg0, %c0_i32 : i32, i32
  }
}

</mosaic_0001>

<llo_original>
// kernel: tpu_custom_call.1
$region0: #{tpu_custom_call.1}
  #allocation0 [shape = 'u32[]', space=smem, size = 0x4, offset = 0x4, fixed_abs, tag = 'smem constant byte address 0x4 - core index']
  #allocation1 [shape = 'u32[72,128]{1,0:T(1,128)}', space=vmem, size = 0x9000, scoped, tag = 'internal scratch']
  %s0 = inlined_call_operand.vmem [shape: f32[8,3], index: 0, kind: input, shape index: {}]
  %s1 = inlined_call_operand.vmem [shape: f32[3,128], index: 1, kind: input, shape index: {}]
  %s2 = inlined_call_operand.vmem [shape: f32[1,128], index: 2, kind: input, shape index: {}]
  %s3 = inlined_call_operand.hbm [shape: bf16[128,512], index: 3, kind: input, shape index: {}]
  %s4 = inlined_call_operand.vmem [shape: f32[1,512], index: 4, kind: input, shape index: {}]
  %s5 = inlined_call_operand.hbm [shape: f32[8,512], index: 5, kind: output, shape index: {}]
  %s6 = sld [smem:[#allocation0]]
  $region34: #{tpu_custom_call.1} parent=0
    _
  %s8 = ssub.s32 1, %s6
  %s9 = scalar_select 0, %s8, %s6
  $region1: #{tpu_custom_call.1} parent=0
    #allocation2 [shape = 'u8[131072]{0}', space=vmem, size = 0x20000, scoped, tag = 'input window, operand 3, single buffered']
    #allocation3 [shape = 's32[1]{0}', space=sflag, size = 0x4, scoped, tag = 'scoped memory for tpu_custom_call.1']
    #allocation4 [shape = 's32[1]{0}', space=sflag, size = 0x4, scoped, tag = 'scoped memory for tpu_custom_call.1']
    #allocation5 [shape = 'u8[16384]{0}', space=vmem, size = 0x4000, scoped, tag = 'output window, operand 0, single buffered']
    %10 = vsyncpa [#allocation3], 0
    %11 = vsyncpa [#allocation4], 0
    // Predicated region
    $region2: #{tpu_custom_call.1} parent=1 // pred_check
      _
    $region3: #{tpu_custom_call.1} parent=1 // pred_check_branch
      %13 = sbr.rel (0) target = $region5
    $region4: #{tpu_custom_call.1} parent=1 // pred_region
      _
    $region5: #{tpu_custom_call.1} parent=1 // pred_fallthru
      _
    // Predicated region
    $region6: #{tpu_custom_call.1} parent=1 // pred_check
      _
    $region7: #{tpu_custom_call.1} parent=1 // pred_check_branch
      %15 = sbr.rel (0) target = $region9
    $region8: #{tpu_custom_call.1} parent=1 // pred_region
      _
    $region9: #{tpu_custom_call.1} parent=1 // pred_fallthru
      _
    // Predicated region
    $region10: #{tpu_custom_call.1} parent=1 // pred_check
      _
    $region11: #{tpu_custom_call.1} parent=1 // pred_check_branch
      %17 = sbr.rel (0) target = $region13
    $region12: #{tpu_custom_call.1} parent=1 // pred_region
      _
    $region13: #{tpu_custom_call.1} parent=1 // pred_fallthru
      _
    // Predicated region
    $region14: #{tpu_custom_call.1} parent=1 // pred_check
      _
    $region15: #{tpu_custom_call.1} parent=1 // pred_check_branch
      %19 = sbr.rel (0) target = $region17
    $region16: #{tpu_custom_call.1} parent=1 // pred_region
      %21 = vsyncadd [#allocation3], 0
      %s22 = sshll.u32 %s3, 4
      %s23 = int_to_ptr.hbm [resolvable:$true] %s22
      %s24 = sshll.u32 [#allocation2], 4
      %s25 = int_to_ptr.vmem [resolvable:$true] %s24
      %30 = dma.hbm_to_vmem [thread:$0]  %s23, 4096, %s25, [#allocation3], 256, 256, 16
    $region17: #{tpu_custom_call.1} parent=1 // pred_fallthru
      _
    // Predicated region
    $region18: #{tpu_custom_call.1} parent=1 // pred_check
      _
    $region19: #{tpu_custom_call.1} parent=1 // pred_check_branch
      %32 = sbr.rel (0) target = $region21
    $region20: #{tpu_custom_call.1} parent=1 // pred_region
      _
    $region21: #{tpu_custom_call.1} parent=1 // pred_fallthru
      _
    // Predicated region
    $region22: #{tpu_custom_call.1} parent=1 // pred_check
      _
    $region23: #{tpu_custom_call.1} parent=1 // pred_check_branch
      %34 = sbr.rel (0) target = $region25
    $region24: #{tpu_custom_call.1} parent=1 // pred_region
      %36 = dma.done [#allocation3], 4096
    $region25: #{tpu_custom_call.1} parent=1 // pred_fallthru
      _
    %v37 = vld [vmem:[%s0] sm:$0xff]
    %v38 = vld [vmem:[%s1] sm:$0x7]
    %40 = vset.pattern.permute.xlu0 0
    %41 = vperm.xlu0 %40, %v37
    %v42 = vpop.permute.xlu0 %41
    %v44 = vperm.slane %v38, 0
    %v45 = vmul.f32 %v42, %v44
    %46 = vset.pattern.permute.xlu0 1
    %47 = vperm.xlu0 %46, %v37
    %v48 = vpop.permute.xlu0 %47
    %v50 = vperm.slane %v38, 1
    %v51 = vmul.f32 %v48, %v50
    %v52 = vadd.f32 %v45, %v51
    %53 = vset.pattern.permute.xlu0 2
    %54 = vperm.xlu0 %53, %v37
    %v55 = vpop.permute.xlu0 %54
    %v57 = vperm.slane %v38, 2
    %v58 = vmul.f32 %v55, %v57
    %v59 = vadd.f32 %v52, %v58
    %v60 = vld [vmem:[%s2] sm:$0x1]
    %v62 = vperm.slane %v60, 0
    %v64 = vadd.f32 %v59, %v62
    %v65 = vmax.f32 %v64, 0.0
    %v66 = vpack.c.bf16 %v65, %v65
    %v67 = vld [vmem:[#allocation2] sm:$0xff]
    %v68 = vld [vmem:[#allocation2 + $0x8] sm:$0xff]
    %v69 = vld [vmem:[#allocation2 + $0x10] sm:$0xff]
    %v70 = vld [vmem:[#allocation2 + $0x18] sm:$0xff]
    %v71 = vld [vmem:[#allocation2 + $0x20] sm:$0xff]
    %v72 = vld [vmem:[#allocation2 + $0x28] sm:$0xff]
    %v73 = vld [vmem:[#allocation2 + $0x30] sm:$0xff]
    %v74 = vld [vmem:[#allocation2 + $0x38] sm:$0xff]
    %v75 = vld [vmem:[#allocation2 + $0x40] sm:$0xff]
    %v76 = vld [vmem:[#allocation2 + $0x48] sm:$0xff]
    %v77 = vld [vmem:[#allocation2 + $0x50] sm:$0xff]
    %v78 = vld [vmem:[#allocation2 + $0x58] sm:$0xff]
    %v79 = vld [vmem:[#allocation2 + $0x60] sm:$0xff]
    %v80 = vld [vmem:[#allocation2 + $0x68] sm:$0xff]
    %v81 = vld [vmem:[#allocation2 + $0x70] sm:$0xff]
    %v82 = vld [vmem:[#allocation2 + $0x78] sm:$0xff]
    %v83 = vld [vmem:[#allocation2 + $0x80] sm:$0xff]
    %v84 = vld [vmem:[#allocation2 + $0x88] sm:$0xff]
    %v85 = vld [vmem:[#allocation2 + $0x90] sm:$0xff]
    %v86 = vld [vmem:[#allocation2 + $0x98] sm:$0xff]
    %v87 = vld [vmem:[#allocation2 + $0xa0] sm:$0xff]
    %v88 = vld [vmem:[#allocation2 + $0xa8] sm:$0xff]
    %v89 = vld [vmem:[#allocation2 + $0xb0] sm:$0xff]
    %v90 = vld [vmem:[#allocation2 + $0xb8] sm:$0xff]
    %v91 = vld [vmem:[#allocation2 + $0xc0] sm:$0xff]
    %v92 = vld [vmem:[#allocation2 + $0xc8] sm:$0xff]
    %v93 = vld [vmem:[#allocation2 + $0xd0] sm:$0xff]
    %v94 = vld [vmem:[#allocation2 + $0xd8] sm:$0xff]
    %v95 = vld [vmem:[#allocation2 + $0xe0] sm:$0xff]
    %v96 = vld [vmem:[#allocation2 + $0xe8] sm:$0xff]
    %v97 = vld [vmem:[#allocation2 + $0xf0] sm:$0xff]
    %v98 = vld [vmem:[#allocation2 + $0xf8] sm:$0xff]
    %v99 = vld [vmem:[%s4] sm:$0xf]
    %v101 = vperm.slane %v99, 0
    %v102 = vperm.slane %v99, 1
    %v103 = vperm.slane %v99, 2
    %v104 = vperm.slane %v99, 3
    %v141 = vunpack.c.l.b16 %v67
    %v142 = vunpack.c.h.b16 %v67
    %v143 = vunpack.c.l.b16 %v68
    %v144 = vunpack.c.h.b16 %v68
    %v145 = vunpack.c.l.b16 %v69
    %v146 = vunpack.c.h.b16 %v69
    %v147 = vunpack.c.l.b16 %v70
    %v148 = vunpack.c.h.b16 %v70
    %v149 = vunpack.c.l.b16 %v71
    %v150 = vunpack.c.h.b16 %v71
    %v151 = vunpack.c.l.b16 %v72
    %v152 = vunpack.c.h.b16 %v72
    %v153 = vunpack.c.l.b16 %v73
    %v154 = vunpack.c.h.b16 %v73
    %v155 = vunpack.c.l.b16 %v74
    %v156 = vunpack.c.h.b16 %v74
    %v157 = vunpack.c.l.b16 %v75
    %v158 = vunpack.c.h.b16 %v75
    %v159 = vunpack.c.l.b16 %v76
    %v160 = vunpack.c.h.b16 %v76
    %v161 = vunpack.c.l.b16 %v77
    %v162 = vunpack.c.h.b16 %v77
    %v163 = vunpack.c.l.b16 %v78
    %v164 = vunpack.c.h.b16 %v78
    %v165 = vunpack.c.l.b16 %v79
    %v166 = vunpack.c.h.b16 %v79
    %v167 = vunpack.c.l.b16 %v80
    %v168 = vunpack.c.h.b16 %v80
    %v169 = vunpack.c.l.b16 %v81
    %v170 = vunpack.c.h.b16 %v81
    %v171 = vunpack.c.l.b16 %v82
    %v172 = vunpack.c.h.b16 %v82
    %v173 = vunpack.c.l.b16 %v83
    %v174 = vunpack.c.h.b16 %v83
    %v175 = vunpack.c.l.b16 %v84
    %v176 = vunpack.c.h.b16 %v84
    %v177 = vunpack.c.l.b16 %v85
    %v178 = vunpack.c.h.b16 %v85
    %v179 = vunpack.c.l.b16 %v86
    %v180 = vunpack.c.h.b16 %v86
    %v181 = vunpack.c.l.b16 %v87
    %v182 = vunpack.c.h.b16 %v87
    %v183 = vunpack.c.l.b16 %v88
    %v184 = vunpack.c.h.b16 %v88
    %v185 = vunpack.c.l.b16 %v89
    %v186 = vunpack.c.h.b16 %v89
    %v187 = vunpack.c.l.b16 %v90
    %v188 = vunpack.c.h.b16 %v90
    %v189 = vunpack.c.l.b16 %v91
    %v190 = vunpack.c.h.b16 %v91
    %v191 = vunpack.c.l.b16 %v92
    %v192 = vunpack.c.h.b16 %v92
    %v193 = vunpack.c.l.b16 %v93
    %v194 = vunpack.c.h.b16 %v93
    %v195 = vunpack.c.l.b16 %v94
    %v196 = vunpack.c.h.b16 %v94
    %v197 = vunpack.c.l.b16 %v95
    %v198 = vunpack.c.h.b16 %v95
    %v199 = vunpack.c.l.b16 %v96
    %v200 = vunpack.c.h.b16 %v96
    %v201 = vunpack.c.l.b16 %v97
    %v202 = vunpack.c.h.b16 %v97
    %v203 = vunpack.c.l.b16 %v98
    %v204 = vunpack.c.h.b16 %v98
    %v205 = vpack.c.b16 %v145, %v141
    %v206 = vpack.c.b16 %v146, %v142
    %v207 = vpack.c.b16 %v147, %v143
    %v208 = vpack.c.b16 %v148, %v144
    %v209 = vpack.c.b16 %v153, %v149
    %v210 = vpack.c.b16 %v154, %v150
    %v211 = vpack.c.b16 %v155, %v151
    %v212 = vpack.c.b16 %v156, %v152
    %v213 = vpack.c.b16 %v161, %v157
    %v214 = vpack.c.b16 %v162, %v158
    %v215 = vpack.c.b16 %v163, %v159
    %v216 = vpack.c.b16 %v164, %v160
    %v217 = vpack.c.b16 %v169, %v165
    %v218 = vpack.c.b16 %v170, %v166
    %v219 = vpack.c.b16 %v171, %v167
    %v220 = vpack.c.b16 %v172, %v168
    %v221 = vpack.c.b16 %v177, %v173
    %v222 = vpack.c.b16 %v178, %v174
    %v223 = vpack.c.b16 %v179, %v175
    %v224 = vpack.c.b16 %v180, %v176
    %v225 = vpack.c.b16 %v185, %v181
    %v226 = vpack.c.b16 %v186, %v182
    %v227 = vpack.c.b16 %v187, %v183
    %v228 = vpack.c.b16 %v188, %v184
    %v229 = vpack.c.b16 %v193, %v189
    %v230 = vpack.c.b16 %v194, %v190
    %v231 = vpack.c.b16 %v195, %v191
    %v232 = vpack.c.b16 %v196, %v192
    %v233 = vpack.c.b16 %v201, %v197
    %v234 = vpack.c.b16 %v202, %v198
    %v235 = vpack.c.b16 %v203, %v199
    %v236 = vpack.c.b16 %v204, %v200
    %269 = vmatpush.bf16.msra.mxu0 %v233
    %270 = vmatpush.bf16.msra.mxu0 %v229
    %271 = vmatpush.bf16.msra.mxu0 %v225
    %272 = vmatpush.bf16.msra.mxu0 %v221
    %273 = vmatpush.bf16.msra.mxu0 %v217
    %274 = vmatpush.bf16.msra.mxu0 %v213
    %275 = vmatpush.bf16.msra.mxu0 %v209
    %276 = vmatpush.bf16.msra.mxu0 %v205
    %277 = vmatmul.bf16.gmra.mxu0 %v66
    %v278 = vpop.f32.mrf.mxu0
    %v279 = vadd.f32 %v101, %v278
    %v280 = vpop.f32.mrf.mxu0
    %281 = vdwg.mxu0
    %282 = vmatpush.bf16.msra.mxu0 %v234
    %283 = vmatpush.bf16.msra.mxu0 %v230
    %284 = vmatpush.bf16.msra.mxu0 %v226
    %285 = vmatpush.bf16.msra.mxu0 %v222
    %286 = vmatpush.bf16.msra.mxu0 %v218
    %287 = vmatpush.bf16.msra.mxu0 %v214
    %288 = vmatpush.bf16.msra.mxu0 %v210
    %289 = vmatpush.bf16.msra.mxu0 %v206
    %290 = vmatmul.bf16.gmra.mxu0 %v66
    %v291 = vpop.f32.mrf.mxu0
    %v292 = vadd.f32 %v102, %v291
    %v293 = vpop.f32.mrf.mxu0
    %294 = vdwg.mxu0
    %295 = vmatpush.bf16.msra.mxu0 %v235
    %296 = vmatpush.bf16.msra.mxu0 %v231
    %297 = vmatpush.bf16.msra.mxu0 %v227
    %298 = vmatpush.bf16.msra.mxu0 %v223
    %299 = vmatpush.bf16.msra.mxu0 %v219
    %300 = vmatpush.bf16.msra.mxu0 %v215
    %301 = vmatpush.bf16.msra.mxu0 %v211
    %302 = vmatpush.bf16.msra.mxu0 %v207
    %303 = vmatmul.bf16.gmra.mxu0 %v66
    %v304 = vpop.f32.mrf.mxu0
    %v305 = vadd.f32 %v103, %v304
    %v306 = vpop.f32.mrf.mxu0
    %307 = vdwg.mxu0
    %308 = vmatpush.bf16.msra.mxu0 %v236
    %309 = vmatpush.bf16.msra.mxu0 %v232
    %310 = vmatpush.bf16.msra.mxu0 %v228
    %311 = vmatpush.bf16.msra.mxu0 %v224
    %312 = vmatpush.bf16.msra.mxu0 %v220
    %313 = vmatpush.bf16.msra.mxu0 %v216
    %314 = vmatpush.bf16.msra.mxu0 %v212
    %315 = vmatpush.bf16.msra.mxu0 %v208
    %316 = vmatmul.bf16.gmra.mxu0 %v66
    %v317 = vpop.f32.mrf.mxu0
    %v318 = vadd.f32 %v104, %v317
    %v319 = vpop.f32.mrf.mxu0
    %320 = vdwg.mxu0
    %321 = vst [vmem:[#allocation5] sm:$0xff] %v279
    %322 = vst [vmem:[#allocation5 + $0x8] sm:$0xff] %v292
    %323 = vst [vmem:[#allocation5 + $0x10] sm:$0xff] %v305
    %324 = vst [vmem:[#allocation5 + $0x18] sm:$0xff] %v318
    // Predicated region
    $region26: #{tpu_custom_call.1} parent=1 // pred_check
      _
    $region27: #{tpu_custom_call.1} parent=1 // pred_check_branch
      %326 = sbr.rel (0) target = $region29
    $region28: #{tpu_custom_call.1} parent=1 // pred_region
      %328 = vsyncadd [#allocation4], 0
      %s330 = sshll.u32 [#allocation5], 4
      %s331 = int_to_ptr.vmem [resolvable:$true] %s330
      %s332 = sshll.u32 %s5, 4
      %s333 = int_to_ptr.hbm [resolvable:$true] %s332
      %335 = dma.vmem_to_hbm [thread:$0]  %s331, 512, %s333, [#allocation4]
    $region29: #{tpu_custom_call.1} parent=1 // pred_fallthru
      _
    // Predicated region
    $region30: #{tpu_custom_call.1} parent=1 // pred_check
      _
    $region31: #{tpu_custom_call.1} parent=1 // pred_check_branch
      %337 = sbr.rel (0) target = $region33
    $region32: #{tpu_custom_call.1} parent=1 // pred_region
      %339 = dma.done [#allocation4], 512
    $region33: #{tpu_custom_call.1} parent=1 // pred_fallthru
      _
    %340 = vsyncpa [#allocation3], 1
    %341 = vsyncpa [#allocation4], 1

</llo_original>
